<compile_context>
chip_gen: v7x
topology: tpu7x:2x2x1
jax: 0.10.0
libtpu: 0.0.40
codegen_flags: <defaults>
</compile_context>

<pallas_src>
import functools

import numpy as np
import jax
import jax.numpy as jnp
from jax import lax
from jax.experimental import pallas as pl
from jax.experimental.pallas import tpu as pltpu

EPS = 1e-5  # BatchNorm1d default eps


def _test_kernel(x_ref, p_ref, out_ref, *, D, H, T):
    """x_ref: (T*Bp, D) raw time-major input; p_ref: packed parameter slab; out_ref: (Bp, L)."""
    Bp = out_ref.shape[0]

    # Static, 8-row-aligned slices of the packed parameter slab.
    w_ih = p_ref[0:D, :]                                   # (D, L)  gates [i,f,o,g], i/f/o * 0.5
    w_hh = p_ref[D:D + H, :]                               # (H, L)
    w12 = p_ref[D + H:D + 2 * H, :]                        # (H, L)  linear_1 ∘ myliner
    r = D + 2 * H
    scale_rows = p_ref[r:r + T, :]                         # (T, L)  per-timestep BN scale
    bias_rows = p_ref[r + T:r + 2 * T, :]                  # (T, L)  shift_t*colsum(W_ih') + b'
    b12 = p_ref[r + 2 * T:r + 2 * T + 1, :]                # (1, L)

    # Hoisted input projection: one MXU matmul for all timesteps on the raw (un-normalized) input.
    xw0 = jnp.dot(x_ref[...], w_ih, preferred_element_type=jnp.float32)   # (T*Bp, L)

    h = jnp.zeros((Bp, H), jnp.float32)
    c = jnp.zeros((Bp, H), jnp.float32)
    # T is small & static: fully unrolled recurrence so adjacent steps interleave around h.
    for t in range(T):
        # BatchNorm (eval) folded as a per-timestep affine on the gate pre-activations.
        # Independent of h -> off the serial chain; scheduler hoists it.
        pre = xw0[t * Bp:(t + 1) * Bp, :] * scale_rows[t:t + 1, :] + bias_rows[t:t + 1, :]
        gates = pre + jnp.dot(h, w_hh, preferred_element_type=jnp.float32)   # (Bp, L)
        # Single full-vreg EUP pass: gate order [i,f,o,g] with i/f/o pre-scaled by 0.5,
        # so sigmoid(z) = 0.5*tanh(z/2)+0.5 and g = tanh(z_g) come from the same tanh.
        u = jnp.tanh(gates)
        s = 0.5 * u + 0.5
        c = s[:, H:2 * H] * c + s[:, 0:H] * u[:, 3 * H:4 * H]
        h = s[:, 2 * H:3 * H] * jnp.tanh(c)

    # Pre-composed TextSubNet.linear_1 ∘ TEST.myliner (dropouts are identity in eval).
    out_ref[...] = jnp.dot(h, w12, preferred_element_type=jnp.float32) + b12


def prepare_test_params(params, eps=EPS):
    """All parameter-only math, executed once: BN fold, gate reorder/prescale, linear
    composition, and packing into a single lane-dense (rows, L) VMEM slab."""
    w_ih_t = jnp.asarray(params["w_ih"]).T.astype(jnp.float32)   # (D, 4H)
    w_hh_t = jnp.asarray(params["w_hh"]).T.astype(jnp.float32)   # (H, 4H)
    b = (params["b_ih"] + params["b_hh"]).astype(jnp.float32)    # (4H,)
    D, G = w_ih_t.shape
    H = G // 4
    T = params["bn_gamma"].shape[0]

    # Gate reorder [i,f,g,o] -> [i,f,o,g]; prescale sigmoid gates (i,f,o) by 0.5.
    perm = np.r_[0:H, H:2 * H, 3 * H:4 * H, 2 * H:3 * H]
    gscale = jnp.concatenate([jnp.full((3 * H,), 0.5, jnp.float32),
                              jnp.ones((H,), jnp.float32)])
    Wih = w_ih_t[:, perm] * gscale
    Whh = w_hh_t[:, perm] * gscale
    bg = b[perm] * gscale

    # BatchNorm1d(seq_len) eval-mode fold -> per-timestep (scale, bias-row) on gate pre-activations.
    bn_scale = params["bn_gamma"] * lax.rsqrt(params["bn_var"] + eps)        # (T,)
    bn_shift = params["bn_beta"] - params["bn_mean"] * bn_scale              # (T,)
    bias_rows = bn_shift[:, None] * jnp.sum(Wih, axis=0)[None, :] + bg[None, :]   # (T, 4H)
    scale_rows = jnp.broadcast_to(bn_scale[:, None], (T, G)).astype(jnp.float32)  # (T, 4H)

    # Compose linear_1 (H -> text_out) with myliner (text_out -> output_dim); no activation between.
    w12 = params["w1"].T @ params["w2"].T                                    # (H, O2)
    b12 = params["b1"] @ params["w2"].T + params["b2"]                       # (O2,)
    O2 = w12.shape[1]

    L = max(128, pl.cdiv(G, 128) * 128, pl.cdiv(O2, 128) * 128)
    padL = lambda a: jnp.pad(a.astype(jnp.float32), ((0, 0), (0, L - a.shape[1])))
    slab = jnp.concatenate(
        [padL(Wih), padL(Whh), padL(w12), padL(scale_rows), padL(bias_rows),
         padL(b12.reshape(1, O2))], axis=0)
    slab = jnp.pad(slab, ((0, (-slab.shape[0]) % 8), (0, 0)))                # sublane multiple
    return slab, dict(D=D, H=H, T=T, O2=O2, L=L)


def make_test_forward(params):
    """Build a jitted forward fn; all parameter prep happens once, outside the per-call path."""
    slab, meta = prepare_test_params(params)
    D, H, T, O2, L = meta["D"], meta["H"], meta["T"], meta["O2"], meta["L"]
    kernel = functools.partial(_test_kernel, D=D, H=H, T=T)
    vmem = pl.BlockSpec(memory_space=pltpu.MemorySpace.VMEM)

    @jax.jit
    def forward(text_x, audio_x, video_x):
        # audio_x / video_x match the PyTorch signature but are unused by TEST.forward.
        del audio_x, video_x
        B = text_x.shape[0]
        Bp = max(8, pl.cdiv(B, 8) * 8)                       # f32 sublane multiple
        x_tm = jnp.transpose(text_x, (1, 0, 2)).astype(jnp.float32)          # (T, B, D)
        x_tm = jnp.pad(x_tm, ((0, 0), (0, Bp - B), (0, 0)))                  # (T, Bp, D)
        x2d = x_tm.reshape(T * Bp, D)

        out = pl.pallas_call(
            kernel,
            out_shape=jax.ShapeDtypeStruct((Bp, L), jnp.float32),
            in_specs=[vmem, vmem],
            out_specs=vmem,
        )(x2d, slab)
        return out[:B, :O2]

    return forward


def reference_forward(text_x, params):
    # Pure-JAX reference of the same forward pass (for a correctness check).
    p = params
    x = ((text_x - p["bn_mean"][None, :, None])
         * (p["bn_gamma"][None, :, None] / jnp.sqrt(p["bn_var"][None, :, None] + EPS))
         + p["bn_beta"][None, :, None])
    B, T, D = x.shape
    H = p["w_hh"].shape[1]
    h = jnp.zeros((B, H), jnp.float32)
    c = jnp.zeros((B, H), jnp.float32)
    for t in range(T):
        gates = x[:, t, :] @ p["w_ih"].T + h @ p["w_hh"].T + p["b_ih"] + p["b_hh"]
        i = jax.nn.sigmoid(gates[:, :H])
        f = jax.nn.sigmoid(gates[:, H:2 * H])
        g = jnp.tanh(gates[:, 2 * H:3 * H])
        o = jax.nn.sigmoid(gates[:, 3 * H:])
        c = f * c + i * g
        h = o * jnp.tanh(c)
    y1 = h @ p["w1"].T + p["b1"]
    return y1 @ p["w2"].T + p["b2"]


def init_params(key, text_in, seq_len, text_hidden, text_out, output_dim):
    ks = jax.random.split(key, 8)
    kH = 1.0 / np.sqrt(text_hidden)
    kO1 = 1.0 / np.sqrt(text_hidden)
    kO2 = 1.0 / np.sqrt(text_out)
    u = lambda k, shape, b: jax.random.uniform(k, shape, jnp.float32, minval=-b, maxval=b)
    return {
        # BatchNorm1d(seq_len) — eval mode, default init
        "bn_gamma": jnp.ones((seq_len,), jnp.float32),
        "bn_beta": jnp.zeros((seq_len,), jnp.float32),
        "bn_mean": jnp.zeros((seq_len,), jnp.float32),
        "bn_var": jnp.ones((seq_len,), jnp.float32),
        # LSTM (1 layer, unidirectional), PyTorch default U(-1/sqrt(H), 1/sqrt(H))
        "w_ih": u(ks[0], (4 * text_hidden, text_in), kH),
        "w_hh": u(ks[1], (4 * text_hidden, text_hidden), kH),
        "b_ih": u(ks[2], (4 * text_hidden,), kH),
        "b_hh": u(ks[3], (4 * text_hidden,), kH),
        # TextSubNet.linear_1
        "w1": u(ks[4], (text_out, text_hidden), kO1),
        "b1": u(ks[5], (text_out,), kO1),
        # TEST.myliner
        "w2": u(ks[6], (output_dim, text_out), kO2),
        "b2": u(ks[7], (output_dim,), kO2),
    }


if __name__ == "__main__":
    # Small, shape-consistent config:
    #   feature_dims=(32,16,16), hidden_dims=(_, _, text_hidden=32), text_out=16,
    #   seq_lens[0]=8, train_mode='regression' -> output_dim=1, batch=2
    batch, seq_len = 2, 8
    text_in, audio_in, video_in = 32, 16, 16
    text_hidden, text_out, output_dim = 32, 16, 1

    key = jax.random.PRNGKey(0)
    k_data, k_param = jax.random.split(key)
    kt, ka, kv = jax.random.split(k_data, 3)
    text_x = jax.random.normal(kt, (batch, seq_len, text_in), jnp.float32)
    audio_x = jax.random.normal(ka, (batch, audio_in), jnp.float32)   # unused by forward
    video_x = jax.random.normal(kv, (batch, video_in), jnp.float32)   # unused by forward

    params = init_params(k_param, text_in, seq_len, text_hidden, text_out, output_dim)

    forward = make_test_forward(params)       # parameter-only prep hoisted out of the call path
    out = forward(text_x, audio_x, video_x)
    out = jax.block_until_ready(out)

    ref = jax.block_until_ready(reference_forward(text_x, params))
    np.testing.assert_allclose(np.asarray(out), np.asarray(ref), rtol=1e-4, atol=1e-4)

    # TODO(synk): Dropout layers are identity (inference mode); BatchNorm1d uses eval running stats.
    print("KERNEL_OK")
</pallas_src>

<mosaic_0001>
module attributes {stable_mosaic.version = 11 : i64} {
  func.func @_test_kernel(%arg0: memref<64x32xf32, #tpu.memory_space<vmem>>, %arg1: memref<120x128xf32, #tpu.memory_space<vmem>>, %arg2: memref<8x128xf32, #tpu.memory_space<vmem>>) attributes {dimension_semantics = [], scalar_prefetch = 0 : i64, scratch_operands = 0 : i64, tpu.core_type = #tpu.core_type<tc>} {
    %c0 = arith.constant 0 : index
    %c0_0 = arith.constant 0 : index
    %0 = vector.load %arg1[%c0, %c0_0] : memref<120x128xf32, #tpu.memory_space<vmem>>, vector<32x128xf32>
    %c32 = arith.constant 32 : index
    %c0_1 = arith.constant 0 : index
    %1 = vector.load %arg1[%c32, %c0_1] : memref<120x128xf32, #tpu.memory_space<vmem>>, vector<32x128xf32>
    %c64 = arith.constant 64 : index
    %c0_2 = arith.constant 0 : index
    %2 = vector.load %arg1[%c64, %c0_2] : memref<120x128xf32, #tpu.memory_space<vmem>>, vector<32x128xf32>
    %c96 = arith.constant 96 : index
    %c0_3 = arith.constant 0 : index
    %3 = vector.load %arg1[%c96, %c0_3] : memref<120x128xf32, #tpu.memory_space<vmem>>, vector<8x128xf32>
    %c104 = arith.constant 104 : index
    %c0_4 = arith.constant 0 : index
    %4 = vector.load %arg1[%c104, %c0_4] : memref<120x128xf32, #tpu.memory_space<vmem>>, vector<8x128xf32>
    %c112 = arith.constant 112 : index
    %c0_5 = arith.constant 0 : index
    %5 = vector.load %arg1[%c112, %c0_5] : memref<120x128xf32, #tpu.memory_space<vmem>>, vector<1x128xf32>
    %c0_6 = arith.constant 0 : index
    %c0_7 = arith.constant 0 : index
    %6 = vector.load %arg0[%c0_6, %c0_7] : memref<64x32xf32, #tpu.memory_space<vmem>>, vector<64x32xf32>
    %cst = arith.constant dense<0.000000e+00> : vector<64x128xf32>
    %7 = tpu.matmul %6, %0, %cst {dimension_numbers = #tpu.dot_dimension_numbers<[1], [0], [0], [1], [0, 0, 1, 1], [], []>} : vector<64x32xf32>, vector<32x128xf32>, vector<64x128xf32> -> vector<64x128xf32>
    %cst_8 = arith.constant 0.000000e+00 : f32
    %8 = vector.broadcast %cst_8 : f32 to vector<8x32xf32>
    %cst_9 = arith.constant 0.000000e+00 : f32
    %9 = vector.broadcast %cst_9 : f32 to vector<8x32xf32>
    %10 = vector.extract_strided_slice %7 {offsets = [0, 0], sizes = [8, 128], strides = [1, 1]} : vector<64x128xf32> to vector<8x128xf32>
    %11 = vector.extract_strided_slice %3 {offsets = [0, 0], sizes = [1, 128], strides = [1, 1]} : vector<8x128xf32> to vector<1x128xf32>
    %12 = vector.broadcast %11 : vector<1x128xf32> to vector<8x128xf32>
    %13 = arith.mulf %10, %12 : vector<8x128xf32>
    %14 = vector.extract_strided_slice %4 {offsets = [0, 0], sizes = [1, 128], strides = [1, 1]} : vector<8x128xf32> to vector<1x128xf32>
    %15 = vector.broadcast %14 : vector<1x128xf32> to vector<8x128xf32>
    %16 = arith.addf %13, %15 : vector<8x128xf32>
    %cst_10 = arith.constant dense<0.000000e+00> : vector<8x128xf32>
    %17 = tpu.matmul %8, %1, %cst_10 {dimension_numbers = #tpu.dot_dimension_numbers<[1], [0], [0], [1], [0, 0, 1, 1], [], []>} : vector<8x32xf32>, vector<32x128xf32>, vector<8x128xf32> -> vector<8x128xf32>
    %18 = arith.addf %16, %17 : vector<8x128xf32>
    %19 = math.tanh %18 : vector<8x128xf32>
    %cst_11 = arith.constant 5.000000e-01 : f32
    %20 = vector.broadcast %cst_11 : f32 to vector<8x128xf32>
    %21 = arith.mulf %20, %19 : vector<8x128xf32>
    %cst_12 = arith.constant 5.000000e-01 : f32
    %22 = vector.broadcast %cst_12 : f32 to vector<8x128xf32>
    %23 = arith.addf %21, %22 : vector<8x128xf32>
    %24 = vector.extract_strided_slice %23 {offsets = [0, 32], sizes = [8, 32], strides = [1, 1]} : vector<8x128xf32> to vector<8x32xf32>
    %25 = arith.mulf %24, %9 : vector<8x32xf32>
    %26 = vector.extract_strided_slice %23 {offsets = [0, 0], sizes = [8, 32], strides = [1, 1]} : vector<8x128xf32> to vector<8x32xf32>
    %27 = vector.extract_strided_slice %19 {offsets = [0, 96], sizes = [8, 32], strides = [1, 1]} : vector<8x128xf32> to vector<8x32xf32>
    %28 = arith.mulf %26, %27 : vector<8x32xf32>
    %29 = arith.addf %25, %28 : vector<8x32xf32>
    %30 = vector.extract_strided_slice %23 {offsets = [0, 64], sizes = [8, 32], strides = [1, 1]} : vector<8x128xf32> to vector<8x32xf32>
    %31 = math.tanh %29 : vector<8x32xf32>
    %32 = arith.mulf %30, %31 : vector<8x32xf32>
    %33 = vector.extract_strided_slice %7 {offsets = [8, 0], sizes = [8, 128], strides = [1, 1]} : vector<64x128xf32> to vector<8x128xf32>
    %34 = vector.extract_strided_slice %3 {offsets = [1, 0], sizes = [1, 128], strides = [1, 1]} : vector<8x128xf32> to vector<1x128xf32>
    %35 = vector.broadcast %34 : vector<1x128xf32> to vector<8x128xf32>
    %36 = arith.mulf %33, %35 : vector<8x128xf32>
    %37 = vector.extract_strided_slice %4 {offsets = [1, 0], sizes = [1, 128], strides = [1, 1]} : vector<8x128xf32> to vector<1x128xf32>
    %38 = vector.broadcast %37 : vector<1x128xf32> to vector<8x128xf32>
    %39 = arith.addf %36, %38 : vector<8x128xf32>
    %cst_13 = arith.constant dense<0.000000e+00> : vector<8x128xf32>
    %40 = tpu.matmul %32, %1, %cst_13 {dimension_numbers = #tpu.dot_dimension_numbers<[1], [0], [0], [1], [0, 0, 1, 1], [], []>} : vector<8x32xf32>, vector<32x128xf32>, vector<8x128xf32> -> vector<8x128xf32>
    %41 = arith.addf %39, %40 : vector<8x128xf32>
    %42 = math.tanh %41 : vector<8x128xf32>
    %cst_14 = arith.constant 5.000000e-01 : f32
    %43 = vector.broadcast %cst_14 : f32 to vector<8x128xf32>
    %44 = arith.mulf %43, %42 : vector<8x128xf32>
    %cst_15 = arith.constant 5.000000e-01 : f32
    %45 = vector.broadcast %cst_15 : f32 to vector<8x128xf32>
    %46 = arith.addf %44, %45 : vector<8x128xf32>
    %47 = vector.extract_strided_slice %46 {offsets = [0, 32], sizes = [8, 32], strides = [1, 1]} : vector<8x128xf32> to vector<8x32xf32>
    %48 = arith.mulf %47, %29 : vector<8x32xf32>
    %49 = vector.extract_strided_slice %46 {offsets = [0, 0], sizes = [8, 32], strides = [1, 1]} : vector<8x128xf32> to vector<8x32xf32>
    %50 = vector.extract_strided_slice %42 {offsets = [0, 96], sizes = [8, 32], strides = [1, 1]} : vector<8x128xf32> to vector<8x32xf32>
    %51 = arith.mulf %49, %50 : vector<8x32xf32>
    %52 = arith.addf %48, %51 : vector<8x32xf32>
    %53 = vector.extract_strided_slice %46 {offsets = [0, 64], sizes = [8, 32], strides = [1, 1]} : vector<8x128xf32> to vector<8x32xf32>
    %54 = math.tanh %52 : vector<8x32xf32>
    %55 = arith.mulf %53, %54 : vector<8x32xf32>
    %56 = vector.extract_strided_slice %7 {offsets = [16, 0], sizes = [8, 128], strides = [1, 1]} : vector<64x128xf32> to vector<8x128xf32>
    %57 = vector.extract_strided_slice %3 {offsets = [2, 0], sizes = [1, 128], strides = [1, 1]} : vector<8x128xf32> to vector<1x128xf32>
    %58 = vector.broadcast %57 : vector<1x128xf32> to vector<8x128xf32>
    %59 = arith.mulf %56, %58 : vector<8x128xf32>
    %60 = vector.extract_strided_slice %4 {offsets = [2, 0], sizes = [1, 128], strides = [1, 1]} : vector<8x128xf32> to vector<1x128xf32>
    %61 = vector.broadcast %60 : vector<1x128xf32> to vector<8x128xf32>
    %62 = arith.addf %59, %61 : vector<8x128xf32>
    %cst_16 = arith.constant dense<0.000000e+00> : vector<8x128xf32>
    %63 = tpu.matmul %55, %1, %cst_16 {dimension_numbers = #tpu.dot_dimension_numbers<[1], [0], [0], [1], [0, 0, 1, 1], [], []>} : vector<8x32xf32>, vector<32x128xf32>, vector<8x128xf32> -> vector<8x128xf32>
    %64 = arith.addf %62, %63 : vector<8x128xf32>
    %65 = math.tanh %64 : vector<8x128xf32>
    %cst_17 = arith.constant 5.000000e-01 : f32
    %66 = vector.broadcast %cst_17 : f32 to vector<8x128xf32>
    %67 = arith.mulf %66, %65 : vector<8x128xf32>
    %cst_18 = arith.constant 5.000000e-01 : f32
    %68 = vector.broadcast %cst_18 : f32 to vector<8x128xf32>
    %69 = arith.addf %67, %68 : vector<8x128xf32>
    %70 = vector.extract_strided_slice %69 {offsets = [0, 32], sizes = [8, 32], strides = [1, 1]} : vector<8x128xf32> to vector<8x32xf32>
    %71 = arith.mulf %70, %52 : vector<8x32xf32>
    %72 = vector.extract_strided_slice %69 {offsets = [0, 0], sizes = [8, 32], strides = [1, 1]} : vector<8x128xf32> to vector<8x32xf32>
    %73 = vector.extract_strided_slice %65 {offsets = [0, 96], sizes = [8, 32], strides = [1, 1]} : vector<8x128xf32> to vector<8x32xf32>
    %74 = arith.mulf %72, %73 : vector<8x32xf32>
    %75 = arith.addf %71, %74 : vector<8x32xf32>
    %76 = vector.extract_strided_slice %69 {offsets = [0, 64], sizes = [8, 32], strides = [1, 1]} : vector<8x128xf32> to vector<8x32xf32>
    %77 = math.tanh %75 : vector<8x32xf32>
    %78 = arith.mulf %76, %77 : vector<8x32xf32>
    %79 = vector.extract_strided_slice %7 {offsets = [24, 0], sizes = [8, 128], strides = [1, 1]} : vector<64x128xf32> to vector<8x128xf32>
    %80 = vector.extract_strided_slice %3 {offsets = [3, 0], sizes = [1, 128], strides = [1, 1]} : vector<8x128xf32> to vector<1x128xf32>
    %81 = vector.broadcast %80 : vector<1x128xf32> to vector<8x128xf32>
    %82 = arith.mulf %79, %81 : vector<8x128xf32>
    %83 = vector.extract_strided_slice %4 {offsets = [3, 0], sizes = [1, 128], strides = [1, 1]} : vector<8x128xf32> to vector<1x128xf32>
    %84 = vector.broadcast %83 : vector<1x128xf32> to vector<8x128xf32>
    %85 = arith.addf %82, %84 : vector<8x128xf32>
    %cst_19 = arith.constant dense<0.000000e+00> : vector<8x128xf32>
    %86 = tpu.matmul %78, %1, %cst_19 {dimension_numbers = #tpu.dot_dimension_numbers<[1], [0], [0], [1], [0, 0, 1, 1], [], []>} : vector<8x32xf32>, vector<32x128xf32>, vector<8x128xf32> -> vector<8x128xf32>
    %87 = arith.addf %85, %86 : vector<8x128xf32>
    %88 = math.tanh %87 : vector<8x128xf32>
    %cst_20 = arith.constant 5.000000e-01 : f32
    %89 = vector.broadcast %cst_20 : f32 to vector<8x128xf32>
    %90 = arith.mulf %89, %88 : vector<8x128xf32>
    %cst_21 = arith.constant 5.000000e-01 : f32
    %91 = vector.broadcast %cst_21 : f32 to vector<8x128xf32>
    %92 = arith.addf %90, %91 : vector<8x128xf32>
    %93 = vector.extract_strided_slice %92 {offsets = [0, 32], sizes = [8, 32], strides = [1, 1]} : vector<8x128xf32> to vector<8x32xf32>
    %94 = arith.mulf %93, %75 : vector<8x32xf32>
    %95 = vector.extract_strided_slice %92 {offsets = [0, 0], sizes = [8, 32], strides = [1, 1]} : vector<8x128xf32> to vector<8x32xf32>
    %96 = vector.extract_strided_slice %88 {offsets = [0, 96], sizes = [8, 32], strides = [1, 1]} : vector<8x128xf32> to vector<8x32xf32>
    %97 = arith.mulf %95, %96 : vector<8x32xf32>
    %98 = arith.addf %94, %97 : vector<8x32xf32>
    %99 = vector.extract_strided_slice %92 {offsets = [0, 64], sizes = [8, 32], strides = [1, 1]} : vector<8x128xf32> to vector<8x32xf32>
    %100 = math.tanh %98 : vector<8x32xf32>
    %101 = arith.mulf %99, %100 : vector<8x32xf32>
    %102 = vector.extract_strided_slice %7 {offsets = [32, 0], sizes = [8, 128], strides = [1, 1]} : vector<64x128xf32> to vector<8x128xf32>
    %103 = vector.extract_strided_slice %3 {offsets = [4, 0], sizes = [1, 128], strides = [1, 1]} : vector<8x128xf32> to vector<1x128xf32>
    %104 = vector.broadcast %103 : vector<1x128xf32> to vector<8x128xf32>
    %105 = arith.mulf %102, %104 : vector<8x128xf32>
    %106 = vector.extract_strided_slice %4 {offsets = [4, 0], sizes = [1, 128], strides = [1, 1]} : vector<8x128xf32> to vector<1x128xf32>
    %107 = vector.broadcast %106 : vector<1x128xf32> to vector<8x128xf32>
    %108 = arith.addf %105, %107 : vector<8x128xf32>
    %cst_22 = arith.constant dense<0.000000e+00> : vector<8x128xf32>
    %109 = tpu.matmul %101, %1, %cst_22 {dimension_numbers = #tpu.dot_dimension_numbers<[1], [0], [0], [1], [0, 0, 1, 1], [], []>} : vector<8x32xf32>, vector<32x128xf32>, vector<8x128xf32> -> vector<8x128xf32>
    %110 = arith.addf %108, %109 : vector<8x128xf32>
    %111 = math.tanh %110 : vector<8x128xf32>
    %cst_23 = arith.constant 5.000000e-01 : f32
    %112 = vector.broadcast %cst_23 : f32 to vector<8x128xf32>
    %113 = arith.mulf %112, %111 : vector<8x128xf32>
    %cst_24 = arith.constant 5.000000e-01 : f32
    %114 = vector.broadcast %cst_24 : f32 to vector<8x128xf32>
    %115 = arith.addf %113, %114 : vector<8x128xf32>
    %116 = vector.extract_strided_slice %115 {offsets = [0, 32], sizes = [8, 32], strides = [1, 1]} : vector<8x128xf32> to vector<8x32xf32>
    %117 = arith.mulf %116, %98 : vector<8x32xf32>
    %118 = vector.extract_strided_slice %115 {offsets = [0, 0], sizes = [8, 32], strides = [1, 1]} : vector<8x128xf32> to vector<8x32xf32>
    %119 = vector.extract_strided_slice %111 {offsets = [0, 96], sizes = [8, 32], strides = [1, 1]} : vector<8x128xf32> to vector<8x32xf32>
    %120 = arith.mulf %118, %119 : vector<8x32xf32>
    %121 = arith.addf %117, %120 : vector<8x32xf32>
    %122 = vector.extract_strided_slice %115 {offsets = [0, 64], sizes = [8, 32], strides = [1, 1]} : vector<8x128xf32> to vector<8x32xf32>
    %123 = math.tanh %121 : vector<8x32xf32>
    %124 = arith.mulf %122, %123 : vector<8x32xf32>
    %125 = vector.extract_strided_slice %7 {offsets = [40, 0], sizes = [8, 128], strides = [1, 1]} : vector<64x128xf32> to vector<8x128xf32>
    %126 = vector.extract_strided_slice %3 {offsets = [5, 0], sizes = [1, 128], strides = [1, 1]} : vector<8x128xf32> to vector<1x128xf32>
    %127 = vector.broadcast %126 : vector<1x128xf32> to vector<8x128xf32>
    %128 = arith.mulf %125, %127 : vector<8x128xf32>
    %129 = vector.extract_strided_slice %4 {offsets = [5, 0], sizes = [1, 128], strides = [1, 1]} : vector<8x128xf32> to vector<1x128xf32>
    %130 = vector.broadcast %129 : vector<1x128xf32> to vector<8x128xf32>
    %131 = arith.addf %128, %130 : vector<8x128xf32>
    %cst_25 = arith.constant dense<0.000000e+00> : vector<8x128xf32>
    %132 = tpu.matmul %124, %1, %cst_25 {dimension_numbers = #tpu.dot_dimension_numbers<[1], [0], [0], [1], [0, 0, 1, 1], [], []>} : vector<8x32xf32>, vector<32x128xf32>, vector<8x128xf32> -> vector<8x128xf32>
    %133 = arith.addf %131, %132 : vector<8x128xf32>
    %134 = math.tanh %133 : vector<8x128xf32>
    %cst_26 = arith.constant 5.000000e-01 : f32
    %135 = vector.broadcast %cst_26 : f32 to vector<8x128xf32>
    %136 = arith.mulf %135, %134 : vector<8x128xf32>
    %cst_27 = arith.constant 5.000000e-01 : f32
    %137 = vector.broadcast %cst_27 : f32 to vector<8x128xf32>
    %138 = arith.addf %136, %137 : vector<8x128xf32>
    %139 = vector.extract_strided_slice %138 {offsets = [0, 32], sizes = [8, 32], strides = [1, 1]} : vector<8x128xf32> to vector<8x32xf32>
    %140 = arith.mulf %139, %121 : vector<8x32xf32>
    %141 = vector.extract_strided_slice %138 {offsets = [0, 0], sizes = [8, 32], strides = [1, 1]} : vector<8x128xf32> to vector<8x32xf32>
    %142 = vector.extract_strided_slice %134 {offsets = [0, 96], sizes = [8, 32], strides = [1, 1]} : vector<8x128xf32> to vector<8x32xf32>
    %143 = arith.mulf %141, %142 : vector<8x32xf32>
    %144 = arith.addf %140, %143 : vector<8x32xf32>
    %145 = vector.extract_strided_slice %138 {offsets = [0, 64], sizes = [8, 32], strides = [1, 1]} : vector<8x128xf32> to vector<8x32xf32>
    %146 = math.tanh %144 : vector<8x32xf32>
    %147 = arith.mulf %145, %146 : vector<8x32xf32>
    %148 = vector.extract_strided_slice %7 {offsets = [48, 0], sizes = [8, 128], strides = [1, 1]} : vector<64x128xf32> to vector<8x128xf32>
    %149 = vector.extract_strided_slice %3 {offsets = [6, 0], sizes = [1, 128], strides = [1, 1]} : vector<8x128xf32> to vector<1x128xf32>
    %150 = vector.broadcast %149 : vector<1x128xf32> to vector<8x128xf32>
    %151 = arith.mulf %148, %150 : vector<8x128xf32>
    %152 = vector.extract_strided_slice %4 {offsets = [6, 0], sizes = [1, 128], strides = [1, 1]} : vector<8x128xf32> to vector<1x128xf32>
    %153 = vector.broadcast %152 : vector<1x128xf32> to vector<8x128xf32>
    %154 = arith.addf %151, %153 : vector<8x128xf32>
    %cst_28 = arith.constant dense<0.000000e+00> : vector<8x128xf32>
    %155 = tpu.matmul %147, %1, %cst_28 {dimension_numbers = #tpu.dot_dimension_numbers<[1], [0], [0], [1], [0, 0, 1, 1], [], []>} : vector<8x32xf32>, vector<32x128xf32>, vector<8x128xf32> -> vector<8x128xf32>
    %156 = arith.addf %154, %155 : vector<8x128xf32>
    %157 = math.tanh %156 : vector<8x128xf32>
    %cst_29 = arith.constant 5.000000e-01 : f32
    %158 = vector.broadcast %cst_29 : f32 to vector<8x128xf32>
    %159 = arith.mulf %158, %157 : vector<8x128xf32>
    %cst_30 = arith.constant 5.000000e-01 : f32
    %160 = vector.broadcast %cst_30 : f32 to vector<8x128xf32>
    %161 = arith.addf %159, %160 : vector<8x128xf32>
    %162 = vector.extract_strided_slice %161 {offsets = [0, 32], sizes = [8, 32], strides = [1, 1]} : vector<8x128xf32> to vector<8x32xf32>
    %163 = arith.mulf %162, %144 : vector<8x32xf32>
    %164 = vector.extract_strided_slice %161 {offsets = [0, 0], sizes = [8, 32], strides = [1, 1]} : vector<8x128xf32> to vector<8x32xf32>
    %165 = vector.extract_strided_slice %157 {offsets = [0, 96], sizes = [8, 32], strides = [1, 1]} : vector<8x128xf32> to vector<8x32xf32>
    %166 = arith.mulf %164, %165 : vector<8x32xf32>
    %167 = arith.addf %163, %166 : vector<8x32xf32>
    %168 = vector.extract_strided_slice %161 {offsets = [0, 64], sizes = [8, 32], strides = [1, 1]} : vector<8x128xf32> to vector<8x32xf32>
    %169 = math.tanh %167 : vector<8x32xf32>
    %170 = arith.mulf %168, %169 : vector<8x32xf32>
    %171 = vector.extract_strided_slice %7 {offsets = [56, 0], sizes = [8, 128], strides = [1, 1]} : vector<64x128xf32> to vector<8x128xf32>
    %172 = vector.extract_strided_slice %3 {offsets = [7, 0], sizes = [1, 128], strides = [1, 1]} : vector<8x128xf32> to vector<1x128xf32>
    %173 = vector.broadcast %172 : vector<1x128xf32> to vector<8x128xf32>
    %174 = arith.mulf %171, %173 : vector<8x128xf32>
    %175 = vector.extract_strided_slice %4 {offsets = [7, 0], sizes = [1, 128], strides = [1, 1]} : vector<8x128xf32> to vector<1x128xf32>
    %176 = vector.broadcast %175 : vector<1x128xf32> to vector<8x128xf32>
    %177 = arith.addf %174, %176 : vector<8x128xf32>
    %cst_31 = arith.constant dense<0.000000e+00> : vector<8x128xf32>
    %178 = tpu.matmul %170, %1, %cst_31 {dimension_numbers = #tpu.dot_dimension_numbers<[1], [0], [0], [1], [0, 0, 1, 1], [], []>} : vector<8x32xf32>, vector<32x128xf32>, vector<8x128xf32> -> vector<8x128xf32>
    %179 = arith.addf %177, %178 : vector<8x128xf32>
    %180 = math.tanh %179 : vector<8x128xf32>
    %cst_32 = arith.constant 5.000000e-01 : f32
    %181 = vector.broadcast %cst_32 : f32 to vector<8x128xf32>
    %182 = arith.mulf %181, %180 : vector<8x128xf32>
    %cst_33 = arith.constant 5.000000e-01 : f32
    %183 = vector.broadcast %cst_33 : f32 to vector<8x128xf32>
    %184 = arith.addf %182, %183 : vector<8x128xf32>
    %185 = vector.extract_strided_slice %184 {offsets = [0, 32], sizes = [8, 32], strides = [1, 1]} : vector<8x128xf32> to vector<8x32xf32>
    %186 = arith.mulf %185, %167 : vector<8x32xf32>
    %187 = vector.extract_strided_slice %184 {offsets = [0, 0], sizes = [8, 32], strides = [1, 1]} : vector<8x128xf32> to vector<8x32xf32>
    %188 = vector.extract_strided_slice %180 {offsets = [0, 96], sizes = [8, 32], strides = [1, 1]} : vector<8x128xf32> to vector<8x32xf32>
    %189 = arith.mulf %187, %188 : vector<8x32xf32>
    %190 = arith.addf %186, %189 : vector<8x32xf32>
    %191 = vector.extract_strided_slice %184 {offsets = [0, 64], sizes = [8, 32], strides = [1, 1]} : vector<8x128xf32> to vector<8x32xf32>
    %192 = math.tanh %190 : vector<8x32xf32>
    %193 = arith.mulf %191, %192 : vector<8x32xf32>
    %cst_34 = arith.constant dense<0.000000e+00> : vector<8x128xf32>
    %194 = tpu.matmul %193, %2, %cst_34 {dimension_numbers = #tpu.dot_dimension_numbers<[1], [0], [0], [1], [0, 0, 1, 1], [], []>} : vector<8x32xf32>, vector<32x128xf32>, vector<8x128xf32> -> vector<8x128xf32>
    %195 = vector.broadcast %5 : vector<1x128xf32> to vector<8x128xf32>
    %196 = arith.addf %194, %195 : vector<8x128xf32>
    %c0_35 = arith.constant 0 : index
    %c0_36 = arith.constant 0 : index
    %197 = vector.load %arg2[%c0_35, %c0_36] : memref<8x128xf32, #tpu.memory_space<vmem>>, vector<8x128xf32>
    tpu.vector_store %arg2[%c0_35, %c0_36], %196 {strides = array<i32>} : memref<8x128xf32, #tpu.memory_space<vmem>>, vector<8x128xf32>,
    return
  }
}

</mosaic_0001>

<llo_original>
// kernel: forward.1
$region0: #{forward.1}
  #allocation0 [shape = 'u32[]', space=smem, size = 0x4, offset = 0x4, fixed_abs, tag = 'smem constant byte address 0x4 - core index']
  #allocation1 [shape = 'u32[144,128]{1,0:T(1,128)}', space=vmem, size = 0x12000, scoped, tag = 'internal scratch']
  %s0 = inlined_call_operand.vmem [shape: f32[64,32], index: 0, kind: input, shape index: {}]
  %s1 = inlined_call_operand.hbm [shape: f32[120,128], index: 1, kind: input, shape index: {}]
  %s2 = inlined_call_operand.vmem [shape: f32[8,128], index: 2, kind: output, shape index: {}]
  %s3 = sld [smem:[#allocation0]]
  $region22: #{forward.1} parent=0
    _
  %s5 = ssub.s32 1, %s3
  %s6 = scalar_select 0, %s5, %s3
  $region1: #{forward.1} parent=0
    #allocation2 [shape = 'u8[61440]{0}', space=vmem, size = 0xf000, scoped, tag = 'input window, operand 1, single buffered']
    #allocation3 [shape = 's32[1]{0}', space=sflag, size = 0x4, scoped, tag = 'scoped memory for forward.1']
    %7 = vsyncpa [#allocation3], 0
    // Predicated region
    $region2: #{forward.1} parent=1 // pred_check
      _
    $region3: #{forward.1} parent=1 // pred_check_branch
      %9 = sbr.rel (0) target = $region5
    $region4: #{forward.1} parent=1 // pred_region
      _
    $region5: #{forward.1} parent=1 // pred_fallthru
      _
    // Predicated region
    $region6: #{forward.1} parent=1 // pred_check
      _
    $region7: #{forward.1} parent=1 // pred_check_branch
      %11 = sbr.rel (0) target = $region9
    $region8: #{forward.1} parent=1 // pred_region
      %s13 = ssub.s32 1920, 1920
      %14 = vsyncadd [#allocation3], %s13
      %s15 = sshll.u32 [#allocation2], 4
      %s16 = int_to_ptr.vmem [resolvable:$true] %s15
      %21 = dma.hbm_to_vmem [thread:$0]  %s1, 1920, %s16, [#allocation3], 128, 128, 8
    $region9: #{forward.1} parent=1 // pred_fallthru
      _
    // Predicated region
    $region10: #{forward.1} parent=1 // pred_check
      _
    $region11: #{forward.1} parent=1 // pred_check_branch
      %23 = sbr.rel (0) target = $region13
    $region12: #{forward.1} parent=1 // pred_region
      %24 = dma.done [#allocation3], 1920
    $region13: #{forward.1} parent=1 // pred_fallthru
      _
    %v25 = vld [vmem:[#allocation2] sm:$0xff]
    %v26 = vld [vmem:[#allocation2 + $0x8] sm:$0xff]
    %v27 = vld [vmem:[#allocation2 + $0x10] sm:$0xff]
    %v28 = vld [vmem:[#allocation2 + $0x18] sm:$0xff]
    %v29 = vld [vmem:[#allocation2 + $0x20] sm:$0xff]
    %v30 = vld [vmem:[#allocation2 + $0x28] sm:$0xff]
    %v31 = vld [vmem:[#allocation2 + $0x30] sm:$0xff]
    %v32 = vld [vmem:[#allocation2 + $0x38] sm:$0xff]
    %v33 = vld [vmem:[#allocation2 + $0x40] sm:$0xff]
    %v34 = vld [vmem:[#allocation2 + $0x48] sm:$0xff]
    %v35 = vld [vmem:[#allocation2 + $0x50] sm:$0xff]
    %v36 = vld [vmem:[#allocation2 + $0x58] sm:$0xff]
    %v37 = vld [vmem:[#allocation2 + $0x60] sm:$0xff]
    %v38 = vld [vmem:[#allocation2 + $0x68] sm:$0xff]
    %v39 = vld [vmem:[#allocation2 + $0x70] sm:$0x1]
    %v40 = vld [vmem:[%s0] sm:$0xff]
    %v41 = vld [vmem:[%s0 + $0x8] sm:$0xff]
    %v42 = vld [vmem:[%s0 + $0x10] sm:$0xff]
    %v43 = vld [vmem:[%s0 + $0x18] sm:$0xff]
    %v44 = vld [vmem:[%s0 + $0x20] sm:$0xff]
    %v45 = vld [vmem:[%s0 + $0x28] sm:$0xff]
    %v46 = vld [vmem:[%s0 + $0x30] sm:$0xff]
    %v47 = vld [vmem:[%s0 + $0x38] sm:$0xff]
    %vm48 = vcmask 261120
    %v50 = vsel %vm48, %v40, 0
    %v53 = vsel %vm48, %v41, 0
    %v56 = vsel %vm48, %v42, 0
    %v59 = vsel %vm48, %v43, 0
    %v62 = vsel %vm48, %v44, 0
    %v65 = vsel %vm48, %v45, 0
    %v68 = vsel %vm48, %v46, 0
    %v71 = vsel %vm48, %v47, 0
    %73 = vmatprep.subr.mxu0 0.0
    %74 = vmatpush1.msra.mxu0 %v25
    %75 = vmatprep.subr.mxu0 0.0
    %76 = vmatpush1.msra.mxu0 %v26
    %77 = vmatprep.subr.mxu0 0.0
    %78 = vmatpush1.msra.mxu0 %v27
    %79 = vmatprep.subr.mxu0 0.0
    %80 = vmatpush1.msra.mxu0 %v28
    %81 = vmatprep.subr.mxu0 0.0
    %82 = vmatpush1.msra.mxu0 0.0
    %83 = vmatprep.subr.mxu0 0.0
    %84 = vmatpush1.msra.mxu0 0.0
    %85 = vmatprep.subr.mxu0 0.0
    %86 = vmatpush1.msra.mxu0 0.0
    %87 = vmatprep.subr.mxu0 0.0
    %88 = vmatpush1.msra.mxu0 0.0
    %89 = vmatprep.subr.mxu0 0.0
    %90 = vmatpush1.msra.mxu0 0.0
    %91 = vmatprep.subr.mxu0 0.0
    %92 = vmatpush1.msra.mxu0 0.0
    %93 = vmatprep.subr.mxu0 0.0
    %94 = vmatpush1.msra.mxu0 0.0
    %95 = vmatprep.subr.mxu0 0.0
    %96 = vmatpush1.msra.mxu0 0.0
    %97 = vmatprep.subr.mxu0 0.0
    %98 = vmatpush1.msra.mxu0 0.0
    %99 = vmatprep.subr.mxu0 0.0
    %100 = vmatpush1.msra.mxu0 0.0
    %101 = vmatprep.subr.mxu0 0.0
    %102 = vmatpush1.msra.mxu0 0.0
    %103 = vmatprep.subr.mxu0 0.0
    %104 = vmatpush1.msra.mxu0 0.0
    %105 = vmatprep.subr.mxu0 0.0
    %106 = vmatpush1.msra.mxu0 0.0
    %107 = vmatprep.subr.mxu0 0.0
    %108 = vmatpush1.msra.mxu0 0.0
    %109 = vmatprep.subr.mxu0 0.0
    %110 = vmatpush1.msra.mxu0 0.0
    %111 = vmatprep.subr.mxu0 0.0
    %112 = vmatpush1.msra.mxu0 0.0
    %113 = vmatprep.subr.mxu0 0.0
    %114 = vmatpush1.msra.mxu0 0.0
    %115 = vmatprep.subr.mxu0 0.0
    %116 = vmatpush1.msra.mxu0 0.0
    %117 = vmatprep.subr.mxu0 0.0
    %118 = vmatpush1.msra.mxu0 0.0
    %119 = vmatprep.subr.mxu0 0.0
    %120 = vmatpush1.msra.mxu0 0.0
    %121 = vmatprep.subr.mxu0 0.0
    %122 = vmatpush1.msra.mxu0 0.0
    %123 = vmatprep.subr.mxu0 0.0
    %124 = vmatpush1.msra.mxu0 0.0
    %125 = vmatprep.subr.mxu0 0.0
    %126 = vmatpush1.msra.mxu0 0.0
    %127 = vmatprep.subr.mxu0 0.0
    %128 = vmatpush1.msra.mxu0 0.0
    %129 = vmatprep.subr.mxu0 0.0
    %130 = vmatpush1.msra.mxu0 0.0
    %131 = vmatprep.subr.mxu0 0.0
    %132 = vmatpush1.msra.mxu0 0.0
    %133 = vmatprep.subr.mxu0 0.0
    %134 = vmatpush1.msra.mxu0 0.0
    %135 = vmatprep.subr.mxu0 0.0
    %136 = vmatpush1.msra.mxu0 0.0
    %137 = vmatprep.mubr.f32.mxu0 0.0
    %138 = vmatmul.mubr.f32.gmra.mrb[0].mxu0 %v50
    %v139 = vpop.f32.mrb[0].mxu0
    %v140 = vadd.f32 0.0, %v139
    %v141 = vpop.f32.mrb[0].mxu0
    %142 = vmatprep.mubr.f32.mxu0 0.0
    %143 = vmatmul.mubr.f32.gmra.mrb[0].mxu0 %v53
    %v144 = vpop.f32.mrb[0].mxu0
    %v145 = vadd.f32 0.0, %v144
    %v146 = vpop.f32.mrb[0].mxu0
    %147 = vmatprep.mubr.f32.mxu0 0.0
    %148 = vmatmul.mubr.f32.gmra.mrb[0].mxu0 %v56
    %v149 = vpop.f32.mrb[0].mxu0
    %v150 = vadd.f32 0.0, %v149
    %v151 = vpop.f32.mrb[0].mxu0
    %152 = vmatprep.mubr.f32.mxu0 0.0
    %153 = vmatmul.mubr.f32.gmra.mrb[0].mxu0 %v59
    %v154 = vpop.f32.mrb[0].mxu0
    %v155 = vadd.f32 0.0, %v154
    %v156 = vpop.f32.mrb[0].mxu0
    %157 = vmatprep.mubr.f32.mxu0 0.0
    %158 = vmatmul.mubr.f32.gmra.mrb[0].mxu0 %v62
    %v159 = vpop.f32.mrb[0].mxu0
    %v160 = vadd.f32 0.0, %v159
    %v161 = vpop.f32.mrb[0].mxu0
    %162 = vmatprep.mubr.f32.mxu0 0.0
    %163 = vmatmul.mubr.f32.gmra.mrb[0].mxu0 %v65
    %v164 = vpop.f32.mrb[0].mxu0
    %v165 = vadd.f32 0.0, %v164
    %v166 = vpop.f32.mrb[0].mxu0
    %167 = vmatprep.mubr.f32.mxu0 0.0
    %168 = vmatmul.mubr.f32.gmra.mrb[0].mxu0 %v68
    %v169 = vpop.f32.mrb[0].mxu0
    %v170 = vadd.f32 0.0, %v169
    %v171 = vpop.f32.mrb[0].mxu0
    %172 = vmatprep.mubr.f32.mxu0 0.0
    %173 = vmatmul.mubr.f32.gmra.mrb[0].mxu0 %v71
    %v174 = vpop.f32.mrb[0].mxu0
    %v175 = vadd.f32 0.0, %v174
    %v176 = vpop.f32.mrb[0].mxu0
    %177 = vdwg.mxu0
    %v178 = vlaneseq
    %v179 = vshrl.u32 %v178, 7
    %v180 = vsub.s32 0, %v179
    %v181 = vrot.slane %v37, %v180
    %v182 = vmul.f32 %v140, %v181
    %v183 = vlaneseq
    %v184 = vshrl.u32 %v183, 7
    %v185 = vsub.s32 0, %v184
    %v186 = vrot.slane %v38, %v185
    %v187 = vadd.f32 %v182, %v186
    %v189 = vsel %vm48, 0.0, 0
    %191 = vmatprep.subr.mxu0 0.0
    %192 = vmatpush1.msra.mxu0 %v29
    %193 = vmatprep.subr.mxu0 0.0
    %194 = vmatpush1.msra.mxu0 %v30
    %195 = vmatprep.subr.mxu0 0.0
    %196 = vmatpush1.msra.mxu0 %v31
    %197 = vmatprep.subr.mxu0 0.0
    %198 = vmatpush1.msra.mxu0 %v32
    %199 = vmatprep.subr.mxu0 0.0
    %200 = vmatpush1.msra.mxu0 0.0
    %201 = vmatprep.subr.mxu0 0.0
    %202 = vmatpush1.msra.mxu0 0.0
    %203 = vmatprep.subr.mxu0 0.0
    %204 = vmatpush1.msra.mxu0 0.0
    %205 = vmatprep.subr.mxu0 0.0
    %206 = vmatpush1.msra.mxu0 0.0
    %207 = vmatprep.subr.mxu0 0.0
    %208 = vmatpush1.msra.mxu0 0.0
    %209 = vmatprep.subr.mxu0 0.0
    %210 = vmatpush1.msra.mxu0 0.0
    %211 = vmatprep.subr.mxu0 0.0
    %212 = vmatpush1.msra.mxu0 0.0
    %213 = vmatprep.subr.mxu0 0.0
    %214 = vmatpush1.msra.mxu0 0.0
    %215 = vmatprep.subr.mxu0 0.0
    %216 = vmatpush1.msra.mxu0 0.0
    %217 = vmatprep.subr.mxu0 0.0
    %218 = vmatpush1.msra.mxu0 0.0
    %219 = vmatprep.subr.mxu0 0.0
    %220 = vmatpush1.msra.mxu0 0.0
    %221 = vmatprep.subr.mxu0 0.0
    %222 = vmatpush1.msra.mxu0 0.0
    %223 = vmatprep.subr.mxu0 0.0
    %224 = vmatpush1.msra.mxu0 0.0
    %225 = vmatprep.subr.mxu0 0.0
    %226 = vmatpush1.msra.mxu0 0.0
    %227 = vmatprep.subr.mxu0 0.0
    %228 = vmatpush1.msra.mxu0 0.0
    %229 = vmatprep.subr.mxu0 0.0
    %230 = vmatpush1.msra.mxu0 0.0
    %231 = vmatprep.subr.mxu0 0.0
    %232 = vmatpush1.msra.mxu0 0.0
    %233 = vmatprep.subr.mxu0 0.0
    %234 = vmatpush1.msra.mxu0 0.0
    %235 = vmatprep.subr.mxu0 0.0
    %236 = vmatpush1.msra.mxu0 0.0
    %237 = vmatprep.subr.mxu0 0.0
    %238 = vmatpush1.msra.mxu0 0.0
    %239 = vmatprep.subr.mxu0 0.0
    %240 = vmatpush1.msra.mxu0 0.0
    %241 = vmatprep.subr.mxu0 0.0
    %242 = vmatpush1.msra.mxu0 0.0
    %243 = vmatprep.subr.mxu0 0.0
    %244 = vmatpush1.msra.mxu0 0.0
    %245 = vmatprep.subr.mxu0 0.0
    %246 = vmatpush1.msra.mxu0 0.0
    %247 = vmatprep.subr.mxu0 0.0
    %248 = vmatpush1.msra.mxu0 0.0
    %249 = vmatprep.subr.mxu0 0.0
    %250 = vmatpush1.msra.mxu0 0.0
    %251 = vmatprep.subr.mxu0 0.0
    %252 = vmatpush1.msra.mxu0 0.0
    %253 = vmatprep.subr.mxu0 0.0
    %254 = vmatpush1.msra.mxu0 0.0
    %255 = vmatprep.mubr.f32.mxu0 0.0
    %256 = vmatmul.mubr.f32.gmra.mrb[0].mxu0 %v189
    %v257 = vpop.f32.mrb[0].mxu0
    %v258 = vadd.f32 0.0, %v257
    %v259 = vpop.f32.mrb[0].mxu0
    %260 = vdwg.mxu0
    %v261 = vadd.f32 %v187, %v258
    %v262 = vtanh.pop %v261
    %v263 = vmul.f32 %v262, 0.5
    %v264 = vadd.f32 %v263, 0.5
    %v265 = vmul.f32 %v264, 0.0
    %267 = vrot.lane.b32.xlu0 %v262, 32
    %v268 = vpop.permute.xlu0 %267
    %v270 = vmul.f32 %v264, %v268
    %272 = vrot.lane.b32.xlu0 %v270, 32
    %v273 = vpop.permute.xlu0 %272
    %v275 = vadd.f32 %v265, %v273
    %v276 = vtanh.pop %v275
    %278 = vrot.lane.b32.xlu0 %v276, 32
    %v279 = vpop.permute.xlu0 %278
    %v281 = vmul.f32 %v264, %v279
    %v282 = vlaneseq
    %v283 = vshrl.u32 %v282, 7
    %v284 = vsub.s32 1, %v283
    %v285 = vrot.slane %v37, %v284
    %v286 = vmul.f32 %v145, %v285
    %v287 = vlaneseq
    %v288 = vshrl.u32 %v287, 7
    %v289 = vsub.s32 1, %v288
    %v290 = vrot.slane %v38, %v289
    %v291 = vadd.f32 %v286, %v290
    %293 = vrot.lane.b32.xlu0 %v281, 64
    %v294 = vpop.permute.xlu0 %293
    %v295 = vsel %vm48, %v294, 0
    %297 = vmatprep.subr.mxu0 0.0
    %298 = vmatpush1.msra.mxu0 %v29
    %299 = vmatprep.subr.mxu0 0.0
    %300 = vmatpush1.msra.mxu0 %v30
    %301 = vmatprep.subr.mxu0 0.0
    %302 = vmatpush1.msra.mxu0 %v31
    %303 = vmatprep.subr.mxu0 0.0
    %304 = vmatpush1.msra.mxu0 %v32
    %305 = vmatprep.subr.mxu0 0.0
    %306 = vmatpush1.msra.mxu0 0.0
    %307 = vmatprep.subr.mxu0 0.0
    %308 = vmatpush1.msra.mxu0 0.0
    %309 = vmatprep.subr.mxu0 0.0
    %310 = vmatpush1.msra.mxu0 0.0
    %311 = vmatprep.subr.mxu0 0.0
    %312 = vmatpush1.msra.mxu0 0.0
    %313 = vmatprep.subr.mxu0 0.0
    %314 = vmatpush1.msra.mxu0 0.0
    %315 = vmatprep.subr.mxu0 0.0
    %316 = vmatpush1.msra.mxu0 0.0
    %317 = vmatprep.subr.mxu0 0.0
    %318 = vmatpush1.msra.mxu0 0.0
    %319 = vmatprep.subr.mxu0 0.0
    %320 = vmatpush1.msra.mxu0 0.0
    %321 = vmatprep.subr.mxu0 0.0
    %322 = vmatpush1.msra.mxu0 0.0
    %323 = vmatprep.subr.mxu0 0.0
    %324 = vmatpush1.msra.mxu0 0.0
    %325 = vmatprep.subr.mxu0 0.0
    %326 = vmatpush1.msra.mxu0 0.0
    %327 = vmatprep.subr.mxu0 0.0
    %328 = vmatpush1.msra.mxu0 0.0
    %329 = vmatprep.subr.mxu0 0.0
    %330 = vmatpush1.msra.mxu0 0.0
    %331 = vmatprep.subr.mxu0 0.0
    %332 = vmatpush1.msra.mxu0 0.0
    %333 = vmatprep.subr.mxu0 0.0
    %334 = vmatpush1.msra.mxu0 0.0
    %335 = vmatprep.subr.mxu0 0.0
    %336 = vmatpush1.msra.mxu0 0.0
    %337 = vmatprep.subr.mxu0 0.0
    %338 = vmatpush1.msra.mxu0 0.0
    %339 = vmatprep.subr.mxu0 0.0
    %340 = vmatpush1.msra.mxu0 0.0
    %341 = vmatprep.subr.mxu0 0.0
    %342 = vmatpush1.msra.mxu0 0.0
    %343 = vmatprep.subr.mxu0 0.0
    %344 = vmatpush1.msra.mxu0 0.0
    %345 = vmatprep.subr.mxu0 0.0
    %346 = vmatpush1.msra.mxu0 0.0
    %347 = vmatprep.subr.mxu0 0.0
    %348 = vmatpush1.msra.mxu0 0.0
    %349 = vmatprep.subr.mxu0 0.0
    %350 = vmatpush1.msra.mxu0 0.0
    %351 = vmatprep.subr.mxu0 0.0
    %352 = vmatpush1.msra.mxu0 0.0
    %353 = vmatprep.subr.mxu0 0.0
    %354 = vmatpush1.msra.mxu0 0.0
    %355 = vmatprep.subr.mxu0 0.0
    %356 = vmatpush1.msra.mxu0 0.0
    %357 = vmatprep.subr.mxu0 0.0
    %358 = vmatpush1.msra.mxu0 0.0
    %359 = vmatprep.subr.mxu0 0.0
    %360 = vmatpush1.msra.mxu0 0.0
    %361 = vmatprep.mubr.f32.mxu0 0.0
    %362 = vmatmul.mubr.f32.gmra.mrb[0].mxu0 %v295
    %v363 = vpop.f32.mrb[0].mxu0
    %v364 = vadd.f32 0.0, %v363
    %v365 = vpop.f32.mrb[0].mxu0
    %366 = vdwg.mxu0
    %v367 = vadd.f32 %v291, %v364
    %v368 = vtanh.pop %v367
    %v369 = vmul.f32 %v368, 0.5
    %v370 = vadd.f32 %v369, 0.5
    %v371 = vmul.f32 %v370, %v275
    %373 = vrot.lane.b32.xlu0 %v368, 32
    %v374 = vpop.permute.xlu0 %373
    %v376 = vmul.f32 %v370, %v374
    %378 = vrot.lane.b32.xlu0 %v376, 32
    %v379 = vpop.permute.xlu0 %378
    %v381 = vadd.f32 %v371, %v379
    %v382 = vtanh.pop %v381
    %384 = vrot.lane.b32.xlu0 %v382, 32
    %v385 = vpop.permute.xlu0 %384
    %v387 = vmul.f32 %v370, %v385
    %v388 = vlaneseq
    %v389 = vshrl.u32 %v388, 7
    %v390 = vsub.s32 2, %v389
    %v391 = vrot.slane %v37, %v390
    %v392 = vmul.f32 %v150, %v391
    %v393 = vlaneseq
    %v394 = vshrl.u32 %v393, 7
    %v395 = vsub.s32 2, %v394
    %v396 = vrot.slane %v38, %v395
    %v397 = vadd.f32 %v392, %v396
    %399 = vrot.lane.b32.xlu0 %v387, 64
    %v400 = vpop.permute.xlu0 %399
    %v401 = vsel %vm48, %v400, 0
    %403 = vmatprep.subr.mxu0 0.0
    %404 = vmatpush1.msra.mxu0 %v29
    %405 = vmatprep.subr.mxu0 0.0
    %406 = vmatpush1.msra.mxu0 %v30
    %407 = vmatprep.subr.mxu0 0.0
    %408 = vmatpush1.msra.mxu0 %v31
    %409 = vmatprep.subr.mxu0 0.0
    %410 = vmatpush1.msra.mxu0 %v32
    %411 = vmatprep.subr.mxu0 0.0
    %412 = vmatpush1.msra.mxu0 0.0
    %413 = vmatprep.subr.mxu0 0.0
    %414 = vmatpush1.msra.mxu0 0.0
    %415 = vmatprep.subr.mxu0 0.0
    %416 = vmatpush1.msra.mxu0 0.0
    %417 = vmatprep.subr.mxu0 0.0
    %418 = vmatpush1.msra.mxu0 0.0
    %419 = vmatprep.subr.mxu0 0.0
    %420 = vmatpush1.msra.mxu0 0.0
    %421 = vmatprep.subr.mxu0 0.0
    %422 = vmatpush1.msra.mxu0 0.0
    %423 = vmatprep.subr.mxu0 0.0
    %424 = vmatpush1.msra.mxu0 0.0
    %425 = vmatprep.subr.mxu0 0.0
    %426 = vmatpush1.msra.mxu0 0.0
    %427 = vmatprep.subr.mxu0 0.0
    %428 = vmatpush1.msra.mxu0 0.0
    %429 = vmatprep.subr.mxu0 0.0
    %430 = vmatpush1.msra.mxu0 0.0
    %431 = vmatprep.subr.mxu0 0.0
    %432 = vmatpush1.msra.mxu0 0.0
    %433 = vmatprep.subr.mxu0 0.0
    %434 = vmatpush1.msra.mxu0 0.0
    %435 = vmatprep.subr.mxu0 0.0
    %436 = vmatpush1.msra.mxu0 0.0
    %437 = vmatprep.subr.mxu0 0.0
    %438 = vmatpush1.msra.mxu0 0.0
    %439 = vmatprep.subr.mxu0 0.0
    %440 = vmatpush1.msra.mxu0 0.0
    %441 = vmatprep.subr.mxu0 0.0
    %442 = vmatpush1.msra.mxu0 0.0
    %443 = vmatprep.subr.mxu0 0.0
    %444 = vmatpush1.msra.mxu0 0.0
    %445 = vmatprep.subr.mxu0 0.0
    %446 = vmatpush1.msra.mxu0 0.0
    %447 = vmatprep.subr.mxu0 0.0
    %448 = vmatpush1.msra.mxu0 0.0
    %449 = vmatprep.subr.mxu0 0.0
    %450 = vmatpush1.msra.mxu0 0.0
    %451 = vmatprep.subr.mxu0 0.0
    %452 = vmatpush1.msra.mxu0 0.0
    %453 = vmatprep.subr.mxu0 0.0
    %454 = vmatpush1.msra.mxu0 0.0
    %455 = vmatprep.subr.mxu0 0.0
    %456 = vmatpush1.msra.mxu0 0.0
    %457 = vmatprep.subr.mxu0 0.0
    %458 = vmatpush1.msra.mxu0 0.0
    %459 = vmatprep.subr.mxu0 0.0
    %460 = vmatpush1.msra.mxu0 0.0
    %461 = vmatprep.subr.mxu0 0.0
    %462 = vmatpush1.msra.mxu0 0.0
    %463 = vmatprep.subr.mxu0 0.0
    %464 = vmatpush1.msra.mxu0 0.0
    %465 = vmatprep.subr.mxu0 0.0
    %466 = vmatpush1.msra.mxu0 0.0
    %467 = vmatprep.mubr.f32.mxu0 0.0
    %468 = vmatmul.mubr.f32.gmra.mrb[0].mxu0 %v401
    %v469 = vpop.f32.mrb[0].mxu0
    %v470 = vadd.f32 0.0, %v469
    %v471 = vpop.f32.mrb[0].mxu0
    %472 = vdwg.mxu0
    %v473 = vadd.f32 %v397, %v470
    %v474 = vtanh.pop %v473
    %v475 = vmul.f32 %v474, 0.5
    %v476 = vadd.f32 %v475, 0.5
    %v477 = vmul.f32 %v476, %v381
    %479 = vrot.lane.b32.xlu0 %v474, 32
    %v480 = vpop.permute.xlu0 %479
    %v482 = vmul.f32 %v476, %v480
    %484 = vrot.lane.b32.xlu0 %v482, 32
    %v485 = vpop.permute.xlu0 %484
    %v487 = vadd.f32 %v477, %v485
    %v488 = vtanh.pop %v487
    %490 = vrot.lane.b32.xlu0 %v488, 32
    %v491 = vpop.permute.xlu0 %490
    %v493 = vmul.f32 %v476, %v491
    %v494 = vlaneseq
    %v495 = vshrl.u32 %v494, 7
    %v496 = vsub.s32 3, %v495
    %v497 = vrot.slane %v37, %v496
    %v498 = vmul.f32 %v155, %v497
    %v499 = vlaneseq
    %v500 = vshrl.u32 %v499, 7
    %v501 = vsub.s32 3, %v500
    %v502 = vrot.slane %v38, %v501
    %v503 = vadd.f32 %v498, %v502
    %505 = vrot.lane.b32.xlu0 %v493, 64
    %v506 = vpop.permute.xlu0 %505
    %v507 = vsel %vm48, %v506, 0
    %509 = vmatprep.subr.mxu0 0.0
    %510 = vmatpush1.msra.mxu0 %v29
    %511 = vmatprep.subr.mxu0 0.0
    %512 = vmatpush1.msra.mxu0 %v30
    %513 = vmatprep.subr.mxu0 0.0
    %514 = vmatpush1.msra.mxu0 %v31
    %515 = vmatprep.subr.mxu0 0.0
    %516 = vmatpush1.msra.mxu0 %v32
    %517 = vmatprep.subr.mxu0 0.0
    %518 = vmatpush1.msra.mxu0 0.0
    %519 = vmatprep.subr.mxu0 0.0
    %520 = vmatpush1.msra.mxu0 0.0
    %521 = vmatprep.subr.mxu0 0.0
    %522 = vmatpush1.msra.mxu0 0.0
    %523 = vmatprep.subr.mxu0 0.0
    %524 = vmatpush1.msra.mxu0 0.0
    %525 = vmatprep.subr.mxu0 0.0
    %526 = vmatpush1.msra.mxu0 0.0
    %527 = vmatprep.subr.mxu0 0.0
    %528 = vmatpush1.msra.mxu0 0.0
    %529 = vmatprep.subr.mxu0 0.0
    %530 = vmatpush1.msra.mxu0 0.0
    %531 = vmatprep.subr.mxu0 0.0
    %532 = vmatpush1.msra.mxu0 0.0
    %533 = vmatprep.subr.mxu0 0.0
    %534 = vmatpush1.msra.mxu0 0.0
    %535 = vmatprep.subr.mxu0 0.0
    %536 = vmatpush1.msra.mxu0 0.0
    %537 = vmatprep.subr.mxu0 0.0
    %538 = vmatpush1.msra.mxu0 0.0
    %539 = vmatprep.subr.mxu0 0.0
    %540 = vmatpush1.msra.mxu0 0.0
    %541 = vmatprep.subr.mxu0 0.0
    %542 = vmatpush1.msra.mxu0 0.0
    %543 = vmatprep.subr.mxu0 0.0
    %544 = vmatpush1.msra.mxu0 0.0
    %545 = vmatprep.subr.mxu0 0.0
    %546 = vmatpush1.msra.mxu0 0.0
    %547 = vmatprep.subr.mxu0 0.0
    %548 = vmatpush1.msra.mxu0 0.0
    %549 = vmatprep.subr.mxu0 0.0
    %550 = vmatpush1.msra.mxu0 0.0
    %551 = vmatprep.subr.mxu0 0.0
    %552 = vmatpush1.msra.mxu0 0.0
    %553 = vmatprep.subr.mxu0 0.0
    %554 = vmatpush1.msra.mxu0 0.0
    %555 = vmatprep.subr.mxu0 0.0
    %556 = vmatpush1.msra.mxu0 0.0
    %557 = vmatprep.subr.mxu0 0.0
    %558 = vmatpush1.msra.mxu0 0.0
    %559 = vmatprep.subr.mxu0 0.0
    %560 = vmatpush1.msra.mxu0 0.0
    %561 = vmatprep.subr.mxu0 0.0
    %562 = vmatpush1.msra.mxu0 0.0
    %563 = vmatprep.subr.mxu0 0.0
    %564 = vmatpush1.msra.mxu0 0.0
    %565 = vmatprep.subr.mxu0 0.0
    %566 = vmatpush1.msra.mxu0 0.0
    %567 = vmatprep.subr.mxu0 0.0
    %568 = vmatpush1.msra.mxu0 0.0
    %569 = vmatprep.subr.mxu0 0.0
    %570 = vmatpush1.msra.mxu0 0.0
    %571 = vmatprep.subr.mxu0 0.0
    %572 = vmatpush1.msra.mxu0 0.0
    %573 = vmatprep.mubr.f32.mxu0 0.0
    %574 = vmatmul.mubr.f32.gmra.mrb[0].mxu0 %v507
    %v575 = vpop.f32.mrb[0].mxu0
    %v576 = vadd.f32 0.0, %v575
    %v577 = vpop.f32.mrb[0].mxu0
    %578 = vdwg.mxu0
    %v579 = vadd.f32 %v503, %v576
    %v580 = vtanh.pop %v579
    %v581 = vmul.f32 %v580, 0.5
    %v582 = vadd.f32 %v581, 0.5
    %v583 = vmul.f32 %v582, %v487
    %585 = vrot.lane.b32.xlu0 %v580, 32
    %v586 = vpop.permute.xlu0 %585
    %v588 = vmul.f32 %v582, %v586
    %590 = vrot.lane.b32.xlu0 %v588, 32
    %v591 = vpop.permute.xlu0 %590
    %v593 = vadd.f32 %v583, %v591
    %v594 = vtanh.pop %v593
    %596 = vrot.lane.b32.xlu0 %v594, 32
    %v597 = vpop.permute.xlu0 %596
    %v599 = vmul.f32 %v582, %v597
    %v600 = vlaneseq
    %v601 = vshrl.u32 %v600, 7
    %v602 = vsub.s32 4, %v601
    %v603 = vrot.slane %v37, %v602
    %v604 = vmul.f32 %v160, %v603
    %v605 = vlaneseq
    %v606 = vshrl.u32 %v605, 7
    %v607 = vsub.s32 4, %v606
    %v608 = vrot.slane %v38, %v607
    %v609 = vadd.f32 %v604, %v608
    %611 = vrot.lane.b32.xlu0 %v599, 64
    %v612 = vpop.permute.xlu0 %611
    %v613 = vsel %vm48, %v612, 0
    %615 = vmatprep.subr.mxu0 0.0
    %616 = vmatpush1.msra.mxu0 %v29
    %617 = vmatprep.subr.mxu0 0.0
    %618 = vmatpush1.msra.mxu0 %v30
    %619 = vmatprep.subr.mxu0 0.0
    %620 = vmatpush1.msra.mxu0 %v31
    %621 = vmatprep.subr.mxu0 0.0
    %622 = vmatpush1.msra.mxu0 %v32
    %623 = vmatprep.subr.mxu0 0.0
    %624 = vmatpush1.msra.mxu0 0.0
    %625 = vmatprep.subr.mxu0 0.0
    %626 = vmatpush1.msra.mxu0 0.0
    %627 = vmatprep.subr.mxu0 0.0
    %628 = vmatpush1.msra.mxu0 0.0
    %629 = vmatprep.subr.mxu0 0.0
    %630 = vmatpush1.msra.mxu0 0.0
    %631 = vmatprep.subr.mxu0 0.0
    %632 = vmatpush1.msra.mxu0 0.0
    %633 = vmatprep.subr.mxu0 0.0
    %634 = vmatpush1.msra.mxu0 0.0
    %635 = vmatprep.subr.mxu0 0.0
    %636 = vmatpush1.msra.mxu0 0.0
    %637 = vmatprep.subr.mxu0 0.0
    %638 = vmatpush1.msra.mxu0 0.0
    %639 = vmatprep.subr.mxu0 0.0
    %640 = vmatpush1.msra.mxu0 0.0
    %641 = vmatprep.subr.mxu0 0.0
    %642 = vmatpush1.msra.mxu0 0.0
    %643 = vmatprep.subr.mxu0 0.0
    %644 = vmatpush1.msra.mxu0 0.0
    %645 = vmatprep.subr.mxu0 0.0
    %646 = vmatpush1.msra.mxu0 0.0
    %647 = vmatprep.subr.mxu0 0.0
    %648 = vmatpush1.msra.mxu0 0.0
    %649 = vmatprep.subr.mxu0 0.0
    %650 = vmatpush1.msra.mxu0 0.0
    %651 = vmatprep.subr.mxu0 0.0
    %652 = vmatpush1.msra.mxu0 0.0
    %653 = vmatprep.subr.mxu0 0.0
    %654 = vmatpush1.msra.mxu0 0.0
    %655 = vmatprep.subr.mxu0 0.0
    %656 = vmatpush1.msra.mxu0 0.0
    %657 = vmatprep.subr.mxu0 0.0
    %658 = vmatpush1.msra.mxu0 0.0
    %659 = vmatprep.subr.mxu0 0.0
    %660 = vmatpush1.msra.mxu0 0.0
    %661 = vmatprep.subr.mxu0 0.0
    %662 = vmatpush1.msra.mxu0 0.0
    %663 = vmatprep.subr.mxu0 0.0
    %664 = vmatpush1.msra.mxu0 0.0
    %665 = vmatprep.subr.mxu0 0.0
    %666 = vmatpush1.msra.mxu0 0.0
    %667 = vmatprep.subr.mxu0 0.0
    %668 = vmatpush1.msra.mxu0 0.0
    %669 = vmatprep.subr.mxu0 0.0
    %670 = vmatpush1.msra.mxu0 0.0
    %671 = vmatprep.subr.mxu0 0.0
    %672 = vmatpush1.msra.mxu0 0.0
    %673 = vmatprep.subr.mxu0 0.0
    %674 = vmatpush1.msra.mxu0 0.0
    %675 = vmatprep.subr.mxu0 0.0
    %676 = vmatpush1.msra.mxu0 0.0
    %677 = vmatprep.subr.mxu0 0.0
    %678 = vmatpush1.msra.mxu0 0.0
    %679 = vmatprep.mubr.f32.mxu0 0.0
    %680 = vmatmul.mubr.f32.gmra.mrb[0].mxu0 %v613
    %v681 = vpop.f32.mrb[0].mxu0
    %v682 = vadd.f32 0.0, %v681
    %v683 = vpop.f32.mrb[0].mxu0
    %684 = vdwg.mxu0
    %v685 = vadd.f32 %v609, %v682
    %v686 = vtanh.pop %v685
    %v687 = vmul.f32 %v686, 0.5
    %v688 = vadd.f32 %v687, 0.5
    %v689 = vmul.f32 %v688, %v593
    %691 = vrot.lane.b32.xlu0 %v686, 32
    %v692 = vpop.permute.xlu0 %691
    %v694 = vmul.f32 %v688, %v692
    %696 = vrot.lane.b32.xlu0 %v694, 32
    %v697 = vpop.permute.xlu0 %696
    %v699 = vadd.f32 %v689, %v697
    %v700 = vtanh.pop %v699
    %702 = vrot.lane.b32.xlu0 %v700, 32
    %v703 = vpop.permute.xlu0 %702
    %v705 = vmul.f32 %v688, %v703
    %v706 = vlaneseq
    %v707 = vshrl.u32 %v706, 7
    %v708 = vsub.s32 5, %v707
    %v709 = vrot.slane %v37, %v708
    %v710 = vmul.f32 %v165, %v709
    %v711 = vlaneseq
    %v712 = vshrl.u32 %v711, 7
    %v713 = vsub.s32 5, %v712
    %v714 = vrot.slane %v38, %v713
    %v715 = vadd.f32 %v710, %v714
    %717 = vrot.lane.b32.xlu0 %v705, 64
    %v718 = vpop.permute.xlu0 %717
    %v719 = vsel %vm48, %v718, 0
    %721 = vmatprep.subr.mxu0 0.0
    %722 = vmatpush1.msra.mxu0 %v29
    %723 = vmatprep.subr.mxu0 0.0
    %724 = vmatpush1.msra.mxu0 %v30
    %725 = vmatprep.subr.mxu0 0.0
    %726 = vmatpush1.msra.mxu0 %v31
    %727 = vmatprep.subr.mxu0 0.0
    %728 = vmatpush1.msra.mxu0 %v32
    %729 = vmatprep.subr.mxu0 0.0
    %730 = vmatpush1.msra.mxu0 0.0
    %731 = vmatprep.subr.mxu0 0.0
    %732 = vmatpush1.msra.mxu0 0.0
    %733 = vmatprep.subr.mxu0 0.0
    %734 = vmatpush1.msra.mxu0 0.0
    %735 = vmatprep.subr.mxu0 0.0
    %736 = vmatpush1.msra.mxu0 0.0
    %737 = vmatprep.subr.mxu0 0.0
    %738 = vmatpush1.msra.mxu0 0.0
    %739 = vmatprep.subr.mxu0 0.0
    %740 = vmatpush1.msra.mxu0 0.0
    %741 = vmatprep.subr.mxu0 0.0
    %742 = vmatpush1.msra.mxu0 0.0
    %743 = vmatprep.subr.mxu0 0.0
    %744 = vmatpush1.msra.mxu0 0.0
    %745 = vmatprep.subr.mxu0 0.0
    %746 = vmatpush1.msra.mxu0 0.0
    %747 = vmatprep.subr.mxu0 0.0
    %748 = vmatpush1.msra.mxu0 0.0
    %749 = vmatprep.subr.mxu0 0.0
    %750 = vmatpush1.msra.mxu0 0.0
    %751 = vmatprep.subr.mxu0 0.0
    %752 = vmatpush1.msra.mxu0 0.0
    %753 = vmatprep.subr.mxu0 0.0
    %754 = vmatpush1.msra.mxu0 0.0
    %755 = vmatprep.subr.mxu0 0.0
    %756 = vmatpush1.msra.mxu0 0.0
    %757 = vmatprep.subr.mxu0 0.0
    %758 = vmatpush1.msra.mxu0 0.0
    %759 = vmatprep.subr.mxu0 0.0
    %760 = vmatpush1.msra.mxu0 0.0
    %761 = vmatprep.subr.mxu0 0.0
    %762 = vmatpush1.msra.mxu0 0.0
    %763 = vmatprep.subr.mxu0 0.0
    %764 = vmatpush1.msra.mxu0 0.0
    %765 = vmatprep.subr.mxu0 0.0
    %766 = vmatpush1.msra.mxu0 0.0
    %767 = vmatprep.subr.mxu0 0.0
    %768 = vmatpush1.msra.mxu0 0.0
    %769 = vmatprep.subr.mxu0 0.0
    %770 = vmatpush1.msra.mxu0 0.0
    %771 = vmatprep.subr.mxu0 0.0
    %772 = vmatpush1.msra.mxu0 0.0
    %773 = vmatprep.subr.mxu0 0.0
    %774 = vmatpush1.msra.mxu0 0.0
    %775 = vmatprep.subr.mxu0 0.0
    %776 = vmatpush1.msra.mxu0 0.0
    %777 = vmatprep.subr.mxu0 0.0
    %778 = vmatpush1.msra.mxu0 0.0
    %779 = vmatprep.subr.mxu0 0.0
    %780 = vmatpush1.msra.mxu0 0.0
    %781 = vmatprep.subr.mxu0 0.0
    %782 = vmatpush1.msra.mxu0 0.0
    %783 = vmatprep.subr.mxu0 0.0
    %784 = vmatpush1.msra.mxu0 0.0
    %785 = vmatprep.mubr.f32.mxu0 0.0
    %786 = vmatmul.mubr.f32.gmra.mrb[0].mxu0 %v719
    %v787 = vpop.f32.mrb[0].mxu0
    %v788 = vadd.f32 0.0, %v787
    %v789 = vpop.f32.mrb[0].mxu0
    %790 = vdwg.mxu0
    %v791 = vadd.f32 %v715, %v788
    %v792 = vtanh.pop %v791
    %v793 = vmul.f32 %v792, 0.5
    %v794 = vadd.f32 %v793, 0.5
    %v795 = vmul.f32 %v794, %v699
    %797 = vrot.lane.b32.xlu0 %v792, 32
    %v798 = vpop.permute.xlu0 %797
    %v800 = vmul.f32 %v794, %v798
    %802 = vrot.lane.b32.xlu0 %v800, 32
    %v803 = vpop.permute.xlu0 %802
    %v805 = vadd.f32 %v795, %v803
    %v806 = vtanh.pop %v805
    %808 = vrot.lane.b32.xlu0 %v806, 32
    %v809 = vpop.permute.xlu0 %808
    %v811 = vmul.f32 %v794, %v809
    %v812 = vlaneseq
    %v813 = vshrl.u32 %v812, 7
    %v814 = vsub.s32 6, %v813
    %v815 = vrot.slane %v37, %v814
    %v816 = vmul.f32 %v170, %v815
    %v817 = vlaneseq
    %v818 = vshrl.u32 %v817, 7
    %v819 = vsub.s32 6, %v818
    %v820 = vrot.slane %v38, %v819
    %v821 = vadd.f32 %v816, %v820
    %823 = vrot.lane.b32.xlu0 %v811, 64
    %v824 = vpop.permute.xlu0 %823
    %v825 = vsel %vm48, %v824, 0
    %827 = vmatprep.subr.mxu0 0.0
    %828 = vmatpush1.msra.mxu0 %v29
    %829 = vmatprep.subr.mxu0 0.0
    %830 = vmatpush1.msra.mxu0 %v30
    %831 = vmatprep.subr.mxu0 0.0
    %832 = vmatpush1.msra.mxu0 %v31
    %833 = vmatprep.subr.mxu0 0.0
    %834 = vmatpush1.msra.mxu0 %v32
    %835 = vmatprep.subr.mxu0 0.0
    %836 = vmatpush1.msra.mxu0 0.0
    %837 = vmatprep.subr.mxu0 0.0
    %838 = vmatpush1.msra.mxu0 0.0
    %839 = vmatprep.subr.mxu0 0.0
    %840 = vmatpush1.msra.mxu0 0.0
    %841 = vmatprep.subr.mxu0 0.0
    %842 = vmatpush1.msra.mxu0 0.0
    %843 = vmatprep.subr.mxu0 0.0
    %844 = vmatpush1.msra.mxu0 0.0
    %845 = vmatprep.subr.mxu0 0.0
    %846 = vmatpush1.msra.mxu0 0.0
    %847 = vmatprep.subr.mxu0 0.0
    %848 = vmatpush1.msra.mxu0 0.0
    %849 = vmatprep.subr.mxu0 0.0
    %850 = vmatpush1.msra.mxu0 0.0
    %851 = vmatprep.subr.mxu0 0.0
    %852 = vmatpush1.msra.mxu0 0.0
    %853 = vmatprep.subr.mxu0 0.0
    %854 = vmatpush1.msra.mxu0 0.0
    %855 = vmatprep.subr.mxu0 0.0
    %856 = vmatpush1.msra.mxu0 0.0
    %857 = vmatprep.subr.mxu0 0.0
    %858 = vmatpush1.msra.mxu0 0.0
    %859 = vmatprep.subr.mxu0 0.0
    %860 = vmatpush1.msra.mxu0 0.0
    %861 = vmatprep.subr.mxu0 0.0
    %862 = vmatpush1.msra.mxu0 0.0
    %863 = vmatprep.subr.mxu0 0.0
    %864 = vmatpush1.msra.mxu0 0.0
    %865 = vmatprep.subr.mxu0 0.0
    %866 = vmatpush1.msra.mxu0 0.0
    %867 = vmatprep.subr.mxu0 0.0
    %868 = vmatpush1.msra.mxu0 0.0
    %869 = vmatprep.subr.mxu0 0.0
    %870 = vmatpush1.msra.mxu0 0.0
    %871 = vmatprep.subr.mxu0 0.0
    %872 = vmatpush1.msra.mxu0 0.0
    %873 = vmatprep.subr.mxu0 0.0
    %874 = vmatpush1.msra.mxu0 0.0
    %875 = vmatprep.subr.mxu0 0.0
    %876 = vmatpush1.msra.mxu0 0.0
    %877 = vmatprep.subr.mxu0 0.0
    %878 = vmatpush1.msra.mxu0 0.0
    %879 = vmatprep.subr.mxu0 0.0
    %880 = vmatpush1.msra.mxu0 0.0
    %881 = vmatprep.subr.mxu0 0.0
    %882 = vmatpush1.msra.mxu0 0.0
    %883 = vmatprep.subr.mxu0 0.0
    %884 = vmatpush1.msra.mxu0 0.0
    %885 = vmatprep.subr.mxu0 0.0
    %886 = vmatpush1.msra.mxu0 0.0
    %887 = vmatprep.subr.mxu0 0.0
    %888 = vmatpush1.msra.mxu0 0.0
    %889 = vmatprep.subr.mxu0 0.0
    %890 = vmatpush1.msra.mxu0 0.0
    %891 = vmatprep.mubr.f32.mxu0 0.0
    %892 = vmatmul.mubr.f32.gmra.mrb[0].mxu0 %v825
    %v893 = vpop.f32.mrb[0].mxu0
    %v894 = vadd.f32 0.0, %v893
    %v895 = vpop.f32.mrb[0].mxu0
    %896 = vdwg.mxu0
    %v897 = vadd.f32 %v821, %v894
    %v898 = vtanh.pop %v897
    %v899 = vmul.f32 %v898, 0.5
    %v900 = vadd.f32 %v899, 0.5
    %v901 = vmul.f32 %v900, %v805
    %903 = vrot.lane.b32.xlu0 %v898, 32
    %v904 = vpop.permute.xlu0 %903
    %v906 = vmul.f32 %v900, %v904
    %908 = vrot.lane.b32.xlu0 %v906, 32
    %v909 = vpop.permute.xlu0 %908
    %v911 = vadd.f32 %v901, %v909
    %v912 = vtanh.pop %v911
    %914 = vrot.lane.b32.xlu0 %v912, 32
    %v915 = vpop.permute.xlu0 %914
    %v917 = vmul.f32 %v900, %v915
    %v918 = vlaneseq
    %v919 = vshrl.u32 %v918, 7
    %v920 = vsub.s32 7, %v919
    %v921 = vrot.slane %v37, %v920
    %v922 = vmul.f32 %v175, %v921
    %v923 = vlaneseq
    %v924 = vshrl.u32 %v923, 7
    %v925 = vsub.s32 7, %v924
    %v926 = vrot.slane %v38, %v925
    %v927 = vadd.f32 %v922, %v926
    %929 = vrot.lane.b32.xlu0 %v917, 64
    %v930 = vpop.permute.xlu0 %929
    %v931 = vsel %vm48, %v930, 0
    %933 = vmatprep.subr.mxu0 0.0
    %934 = vmatpush1.msra.mxu0 %v29
    %935 = vmatprep.subr.mxu0 0.0
    %936 = vmatpush1.msra.mxu0 %v30
    %937 = vmatprep.subr.mxu0 0.0
    %938 = vmatpush1.msra.mxu0 %v31
    %939 = vmatprep.subr.mxu0 0.0
    %940 = vmatpush1.msra.mxu0 %v32
    %941 = vmatprep.subr.mxu0 0.0
    %942 = vmatpush1.msra.mxu0 0.0
    %943 = vmatprep.subr.mxu0 0.0
    %944 = vmatpush1.msra.mxu0 0.0
    %945 = vmatprep.subr.mxu0 0.0
    %946 = vmatpush1.msra.mxu0 0.0
    %947 = vmatprep.subr.mxu0 0.0
    %948 = vmatpush1.msra.mxu0 0.0
    %949 = vmatprep.subr.mxu0 0.0
    %950 = vmatpush1.msra.mxu0 0.0
    %951 = vmatprep.subr.mxu0 0.0
    %952 = vmatpush1.msra.mxu0 0.0
    %953 = vmatprep.subr.mxu0 0.0
    %954 = vmatpush1.msra.mxu0 0.0
    %955 = vmatprep.subr.mxu0 0.0
    %956 = vmatpush1.msra.mxu0 0.0
    %957 = vmatprep.subr.mxu0 0.0
    %958 = vmatpush1.msra.mxu0 0.0
    %959 = vmatprep.subr.mxu0 0.0
    %960 = vmatpush1.msra.mxu0 0.0
    %961 = vmatprep.subr.mxu0 0.0
    %962 = vmatpush1.msra.mxu0 0.0
    %963 = vmatprep.subr.mxu0 0.0
    %964 = vmatpush1.msra.mxu0 0.0
    %965 = vmatprep.subr.mxu0 0.0
    %966 = vmatpush1.msra.mxu0 0.0
    %967 = vmatprep.subr.mxu0 0.0
    %968 = vmatpush1.msra.mxu0 0.0
    %969 = vmatprep.subr.mxu0 0.0
    %970 = vmatpush1.msra.mxu0 0.0
    %971 = vmatprep.subr.mxu0 0.0
    %972 = vmatpush1.msra.mxu0 0.0
    %973 = vmatprep.subr.mxu0 0.0
    %974 = vmatpush1.msra.mxu0 0.0
    %975 = vmatprep.subr.mxu0 0.0
    %976 = vmatpush1.msra.mxu0 0.0
    %977 = vmatprep.subr.mxu0 0.0
    %978 = vmatpush1.msra.mxu0 0.0
    %979 = vmatprep.subr.mxu0 0.0
    %980 = vmatpush1.msra.mxu0 0.0
    %981 = vmatprep.subr.mxu0 0.0
    %982 = vmatpush1.msra.mxu0 0.0
    %983 = vmatprep.subr.mxu0 0.0
    %984 = vmatpush1.msra.mxu0 0.0
    %985 = vmatprep.subr.mxu0 0.0
    %986 = vmatpush1.msra.mxu0 0.0
    %987 = vmatprep.subr.mxu0 0.0
    %988 = vmatpush1.msra.mxu0 0.0
    %989 = vmatprep.subr.mxu0 0.0
    %990 = vmatpush1.msra.mxu0 0.0
    %991 = vmatprep.subr.mxu0 0.0
    %992 = vmatpush1.msra.mxu0 0.0
    %993 = vmatprep.subr.mxu0 0.0
    %994 = vmatpush1.msra.mxu0 0.0
    %995 = vmatprep.subr.mxu0 0.0
    %996 = vmatpush1.msra.mxu0 0.0
    %997 = vmatprep.mubr.f32.mxu0 0.0
    %998 = vmatmul.mubr.f32.gmra.mrb[0].mxu0 %v931
    %v999 = vpop.f32.mrb[0].mxu0
    %v1000 = vadd.f32 0.0, %v999
    %v1001 = vpop.f32.mrb[0].mxu0
    %1002 = vdwg.mxu0
    %v1003 = vadd.f32 %v927, %v1000
    %v1004 = vtanh.pop %v1003
    %v1005 = vmul.f32 %v1004, 0.5
    %v1006 = vadd.f32 %v1005, 0.5
    %v1007 = vmul.f32 %v1006, %v911
    %1009 = vrot.lane.b32.xlu0 %v1004, 32
    %v1010 = vpop.permute.xlu0 %1009
    %v1012 = vmul.f32 %v1006, %v1010
    %1014 = vrot.lane.b32.xlu0 %v1012, 32
    %v1015 = vpop.permute.xlu0 %1014
    %v1017 = vadd.f32 %v1007, %v1015
    %v1018 = vtanh.pop %v1017
    %1020 = vrot.lane.b32.xlu0 %v1018, 32
    %v1021 = vpop.permute.xlu0 %1020
    %v1023 = vmul.f32 %v1006, %v1021
    %v1024 = vlaneseq
    %v1025 = vshrl.u32 %v1024, 7
    %v1026 = vsub.s32 0, %v1025
    %v1027 = vrot.slane %v39, %v1026
    %1029 = vrot.lane.b32.xlu0 %v1023, 64
    %v1030 = vpop.permute.xlu0 %1029
    %v1031 = vsel %vm48, %v1030, 0
    %1033 = vmatprep.subr.mxu0 0.0
    %1034 = vmatpush1.msra.mxu0 %v33
    %1035 = vmatprep.subr.mxu0 0.0
    %1036 = vmatpush1.msra.mxu0 %v34
    %1037 = vmatprep.subr.mxu0 0.0
    %1038 = vmatpush1.msra.mxu0 %v35
    %1039 = vmatprep.subr.mxu0 0.0
    %1040 = vmatpush1.msra.mxu0 %v36
    %1041 = vmatprep.subr.mxu0 0.0
    %1042 = vmatpush1.msra.mxu0 0.0
    %1043 = vmatprep.subr.mxu0 0.0
    %1044 = vmatpush1.msra.mxu0 0.0
    %1045 = vmatprep.subr.mxu0 0.0
    %1046 = vmatpush1.msra.mxu0 0.0
    %1047 = vmatprep.subr.mxu0 0.0
    %1048 = vmatpush1.msra.mxu0 0.0
    %1049 = vmatprep.subr.mxu0 0.0
    %1050 = vmatpush1.msra.mxu0 0.0
    %1051 = vmatprep.subr.mxu0 0.0
    %1052 = vmatpush1.msra.mxu0 0.0
    %1053 = vmatprep.subr.mxu0 0.0
    %1054 = vmatpush1.msra.mxu0 0.0
    %1055 = vmatprep.subr.mxu0 0.0
    %1056 = vmatpush1.msra.mxu0 0.0
    %1057 = vmatprep.subr.mxu0 0.0
    %1058 = vmatpush1.msra.mxu0 0.0
    %1059 = vmatprep.subr.mxu0 0.0
    %1060 = vmatpush1.msra.mxu0 0.0
    %1061 = vmatprep.subr.mxu0 0.0
    %1062 = vmatpush1.msra.mxu0 0.0
    %1063 = vmatprep.subr.mxu0 0.0
    %1064 = vmatpush1.msra.mxu0 0.0
    %1065 = vmatprep.subr.mxu0 0.0
    %1066 = vmatpush1.msra.mxu0 0.0
    %1067 = vmatprep.subr.mxu0 0.0
    %1068 = vmatpush1.msra.mxu0 0.0
    %1069 = vmatprep.subr.mxu0 0.0
    %1070 = vmatpush1.msra.mxu0 0.0
    %1071 = vmatprep.subr.mxu0 0.0
    %1072 = vmatpush1.msra.mxu0 0.0
    %1073 = vmatprep.subr.mxu0 0.0
    %1074 = vmatpush1.msra.mxu0 0.0
    %1075 = vmatprep.subr.mxu0 0.0
    %1076 = vmatpush1.msra.mxu0 0.0
    %1077 = vmatprep.subr.mxu0 0.0
    %1078 = vmatpush1.msra.mxu0 0.0
    %1079 = vmatprep.subr.mxu0 0.0
    %1080 = vmatpush1.msra.mxu0 0.0
    %1081 = vmatprep.subr.mxu0 0.0
    %1082 = vmatpush1.msra.mxu0 0.0
    %1083 = vmatprep.subr.mxu0 0.0
    %1084 = vmatpush1.msra.mxu0 0.0
    %1085 = vmatprep.subr.mxu0 0.0
    %1086 = vmatpush1.msra.mxu0 0.0
    %1087 = vmatprep.subr.mxu0 0.0
    %1088 = vmatpush1.msra.mxu0 0.0
    %1089 = vmatprep.subr.mxu0 0.0
    %1090 = vmatpush1.msra.mxu0 0.0
    %1091 = vmatprep.subr.mxu0 0.0
    %1092 = vmatpush1.msra.mxu0 0.0
    %1093 = vmatprep.subr.mxu0 0.0
    %1094 = vmatpush1.msra.mxu0 0.0
    %1095 = vmatprep.subr.mxu0 0.0
    %1096 = vmatpush1.msra.mxu0 0.0
    %1097 = vmatprep.mubr.f32.mxu0 0.0
    %1098 = vmatmul.mubr.f32.gmra.mrb[0].mxu0 %v1031
    %v1099 = vpop.f32.mrb[0].mxu0
    %v1100 = vadd.f32 %v1027, %v1099
    %v1101 = vpop.f32.mrb[0].mxu0
    %1102 = vdwg.mxu0
    %1103 = vst [vmem:[%s2] sm:$0xff] %v1100
    // Predicated region
    $region14: #{forward.1} parent=1 // pred_check
      _
    $region15: #{forward.1} parent=1 // pred_check_branch
      %1105 = sbr.rel (0) target = $region17
    $region16: #{forward.1} parent=1 // pred_region
      _
    $region17: #{forward.1} parent=1 // pred_fallthru
      _
    // Predicated region
    $region18: #{forward.1} parent=1 // pred_check
      _
    $region19: #{forward.1} parent=1 // pred_check_branch
      %1107 = sbr.rel (0) target = $region21
    $region20: #{forward.1} parent=1 // pred_region
      _
    $region21: #{forward.1} parent=1 // pred_fallthru
      _
    %1108 = vsyncpa [#allocation3], 1

</llo_original>
